<compile_context>
chip_gen: v7x
topology: tpu7x:2x2x1
jax: 0.10.0
libtpu: 0.0.40
codegen_flags: <defaults>
</compile_context>

<pallas_src>
import numpy as np
import jax
import jax.numpy as jnp
from jax.experimental import pallas as pl
from jax.experimental.pallas import tpu as pltpu


_VMEM_LIMIT = 32 * 1024 * 1024  # safe on v5e/v6e (128 MiB phys) and v7x (64 MiB phys)


def _round_up(x, m):
    return (x + m - 1) // m * m


def _pick_tile(requested, dim):
    """Node-tile size: multiple of 8 (sublane), never absurdly larger than the dim."""
    t = min(requested, _round_up(dim, 8))
    return max(8, (t // 8) * 8)


# ---------------------------------------------------------------------------
# Stage 1: y = x @ W^T + b   (tiled over nodes, weights resident in VMEM)
# ---------------------------------------------------------------------------
def _linear_kernel(x_ref, w_ref, b_ref, o_ref):
    acc = jnp.dot(x_ref[...], w_ref[...], preferred_element_type=jnp.float32)
    o_ref[...] = (acc + b_ref[...]).astype(o_ref.dtype)


# ---------------------------------------------------------------------------
# Stage 2: fused gather (center rows + edge row-pairs) + pair-average + concat
# ---------------------------------------------------------------------------
def _make_gather_combine_kernel(raw_nodes, tile_out, unroll):
    def kernel(row_a_ref, row_b_ref,          # scalar-prefetch (SMEM): source rows per output row
               y_ref, ptop_ref, pbot_ref,     # VMEM inputs (resident across the whole grid)
               o_ref,                         # output tile [tile_out, F]
               a_sc, b_sc):                   # VMEM scratch [tile_out, F]
        t = pl.program_id(0)
        base = t * tile_out
        tile_end = base + tile_out

        # ---- fast path: tile lies entirely in the center region -> plain row gather ----
        @pl.when(tile_end <= raw_nodes)
        def _center_only():
            def body(j, carry):
                ra = row_a_ref[base + j]
                a_sc[pl.ds(j, 1), :] = y_ref[pl.ds(ra, 1), :]
                return carry

            jax.lax.fori_loop(0, tile_out, body, 0, unroll=unroll)
            o_ref[...] = a_sc[...].astype(o_ref.dtype)

        # ---- general path: mixed center/edge or pure edge tile ----
        @pl.when(tile_end > raw_nodes)
        def _mixed_or_edge():
            def body(j, carry):
                ra = row_a_ref[base + j]
                rb = row_b_ref[base + j]
                a_sc[pl.ds(j, 1), :] = y_ref[pl.ds(ra, 1), :]
                b_sc[pl.ds(j, 1), :] = y_ref[pl.ds(rb, 1), :]
                return carry

            jax.lax.fori_loop(0, tile_out, body, 0, unroll=unroll)

            a = a_sc[...]
            b = b_sc[...]
            # Edge rows: out[m, f] = 0.5 * (cat[2f] + cat[2f+1]) with cat = [rowA | rowB]
            # (== torch .view(-1, F, 2).mean(2)), expressed as two tiny MXU matmuls against
            # constant 0.5-selection matrices.
            edge_val = (jnp.dot(a, ptop_ref[...], preferred_element_type=jnp.float32)
                        + jnp.dot(b, pbot_ref[...], preferred_element_type=jnp.float32))
            row_ids = base + jax.lax.broadcasted_iota(jnp.int32, (tile_out, 1), 0)
            out = jnp.where(row_ids >= raw_nodes, edge_val, a)   # center rows: copy of rowA
            o_ref[...] = out.astype(o_ref.dtype)

    return kernel


# ---------------------------------------------------------------------------
# Public wrapper — mirrors upconv_layer.forward
# ---------------------------------------------------------------------------
def upconv_layer_pallas(x, weight, bias, upconv_center_indices, upconv_edge_indices,
                        *, tile_rows=512, tile_out=512):
    """x: [raw, in_features]; weight: [7*out, in]; bias: [7*out] -> [4*raw-6, out]."""
    raw, cin = x.shape
    out_f = weight.shape[0] // 7
    assert weight.shape[0] == 7 * out_f
    new = 4 * raw - 6
    r7 = raw * 7
    assert upconv_center_indices.shape[0] == raw
    assert upconv_edge_indices.shape[0] == 2 * (new - raw)

    # ---- stage 1: Linear(in, 7*out), tiled over raw nodes ----
    t_r = _pick_tile(tile_rows, raw)
    grid_a = pl.cdiv(raw, t_r)
    wt = jnp.transpose(weight)                      # one-time weight transform [cin, 7*out]
    b2d = bias.reshape(1, 7 * out_f)
    y = pl.pallas_call(
        _linear_kernel,
        out_shape=jax.ShapeDtypeStruct((raw, 7 * out_f), jnp.float32),
        grid=(grid_a,),
        in_specs=[pl.BlockSpec((t_r, cin), lambda i: (i, 0)),
                  pl.BlockSpec((cin, 7 * out_f), lambda i: (0, 0)),
                  pl.BlockSpec((1, 7 * out_f), lambda i: (0, 0))],
        out_specs=pl.BlockSpec((t_r, 7 * out_f), lambda i: (i, 0)),
        compiler_params=pltpu.CompilerParams(
            dimension_semantics=("parallel",), vmem_limit_bytes=_VMEM_LIMIT),
    )(x, wt, b2d)

    # free row-major reshape: [raw, 7F] -> [raw*7, F]  (== torch .view)
    y_view = y.reshape(r7, out_f)

    # ---- integer-only index preprocessing (no activation HBM traffic) ----
    # output row n < raw uses source row center[n] (A==B); row raw+m uses edge[2m], edge[2m+1].
    row_a = jnp.concatenate([upconv_center_indices, upconv_edge_indices[0::2]]).astype(jnp.int32)
    row_b = jnp.concatenate([upconv_center_indices, upconv_edge_indices[1::2]]).astype(jnp.int32)
    row_a = jnp.clip(row_a, 0, r7 - 1)
    row_b = jnp.clip(row_b, 0, r7 - 1)

    t_o = _pick_tile(tile_out, new)
    grid_b = pl.cdiv(new, t_o)
    pad = grid_b * t_o - new
    if pad:
        row_a = jnp.pad(row_a, (0, pad))
        row_b = jnp.pad(row_b, (0, pad))

    # constant 0.5-selection matrices implementing torch's .view(-1, F, 2).mean(2)
    k = np.arange(2 * out_f)[:, None]
    f = np.arange(out_f)[None, :]
    pair = 0.5 * ((k == 2 * f) | (k == 2 * f + 1)).astype(np.float32)     # [2F, F]
    p_top = jnp.asarray(pair[:out_f])
    p_bot = jnp.asarray(pair[out_f:])

    # ---- stage 2: fused gather + pair-average + concat, tiled over output nodes ----
    # TODO(synk): at very large raw_nodes, keep y_view in HBM (pl.ANY) and gather rows with
    # manual double-buffered make_async_copy instead of holding it VMEM-resident; likewise
    # cast activations to bf16 on v6e/v7x for this memory-bound path.
    unroll = min(8, t_o)
    out = pl.pallas_call(
        _make_gather_combine_kernel(raw, t_o, unroll),
        out_shape=jax.ShapeDtypeStruct((new, out_f), jnp.float32),
        grid_spec=pltpu.PrefetchScalarGridSpec(
            num_scalar_prefetch=2,
            grid=(grid_b,),
            in_specs=[pl.BlockSpec((r7, out_f), lambda i, ra, rb: (0, 0)),
                      pl.BlockSpec((out_f, out_f), lambda i, ra, rb: (0, 0)),
                      pl.BlockSpec((out_f, out_f), lambda i, ra, rb: (0, 0))],
            out_specs=pl.BlockSpec((t_o, out_f), lambda i, ra, rb: (i, 0)),
            scratch_shapes=[pltpu.VMEM((t_o, out_f), jnp.float32),
                            pltpu.VMEM((t_o, out_f), jnp.float32)]),
        compiler_params=pltpu.CompilerParams(
            dimension_semantics=("parallel",), vmem_limit_bytes=_VMEM_LIMIT),
    )(row_a, row_b, y_view, p_top, p_bot)
    return out


# ---------------------------------------------------------------------------
# Pure-JAX reference mirroring the PyTorch forward 1:1
# ---------------------------------------------------------------------------
def _reference(x, weight, bias, center_idx, edge_idx):
    raw, _ = x.shape
    out_f = weight.shape[0] // 7
    y = x @ weight.T + bias                              # [raw, 7F]
    yv = y.reshape(raw * 7, out_f)                       # .view(raw*7, F)
    x1 = yv[center_idx]                                  # [raw, F]
    x2 = yv[edge_idx].reshape(-1, out_f, 2)              # [new-raw, F, 2] (row-major == torch .view)
    return jnp.concatenate([x1, x2.mean(axis=2)], axis=0)  # [new, F]


if __name__ == "__main__":
    raw = 42                      # icosahedron level-1 node count
    new = 4 * raw - 6             # 162
    in_f, out_f = 16, 32

    key = jax.random.PRNGKey(0)
    ks = jax.random.split(key, 5)
    x = jax.random.normal(ks[0], (raw, in_f), jnp.float32)
    # nn.Linear(in_features, 7*out_features)
    weight = 0.1 * jax.random.normal(ks[1], (7 * out_f, in_f), jnp.float32)
    bias = 0.1 * jax.random.normal(ks[2], (7 * out_f,), jnp.float32)
    # deterministic synthetic mesh index tables (same style as the PyTorch module expects)
    center_idx = jax.random.randint(ks[3], (raw,), 0, raw * 7)
    edge_idx = jax.random.randint(ks[4], (2 * (new - raw),), 0, raw * 7)

    # small tiles so the demo exercises multi-step grids AND both pl.when paths
    # (grid_a=3; grid_b=11 with pure-center, mixed, and pure-edge tiles).
    out = upconv_layer_pallas(x, weight, bias, center_idx, edge_idx,
                              tile_rows=16, tile_out=16)
    out = jax.block_until_ready(out)
    assert out.shape == (new, out_f), out.shape

    ref = _reference(x, weight, bias, center_idx, edge_idx)
    err = float(jnp.max(jnp.abs(out - ref)))
    assert jnp.allclose(out, ref, atol=1e-4, rtol=1e-4), err

    print("KERNEL_OK")
</pallas_src>

<mosaic_0001>
module attributes {stable_mosaic.version = 11 : i64} {
  func.func @_linear_kernel(%arg0: i32, %arg1: memref<16x16xf32, #tpu.memory_space<vmem>>, %arg2: memref<16x224xf32, #tpu.memory_space<vmem>>, %arg3: memref<1x224xf32, #tpu.memory_space<vmem>>, %arg4: memref<16x224xf32, #tpu.memory_space<vmem>>) attributes {dimension_semantics = [#tpu.dimension_semantics<parallel>], iteration_bounds = array<i64: 3>, scalar_prefetch = 0 : i64, scratch_operands = 0 : i64, tpu.core_type = #tpu.core_type<tc>, window_params = [{transform_indices = @transform_0, window_bounds = array<i64: 16, 16>}, {pipeline_mode = #tpu.pipeline_mode<synchronous>, transform_indices = @transform_1, window_bounds = array<i64: 16, 224>}, {pipeline_mode = #tpu.pipeline_mode<synchronous>, transform_indices = @transform_2, window_bounds = array<i64: 1, 224>}, {transform_indices = @transform_3, window_bounds = array<i64: 16, 224>}]} {
    %c0 = arith.constant 0 : index
    %c0_0 = arith.constant 0 : index
    %0 = vector.load %arg1[%c0, %c0_0] : memref<16x16xf32, #tpu.memory_space<vmem>>, vector<16x16xf32>
    %c0_1 = arith.constant 0 : index
    %c0_2 = arith.constant 0 : index
    %1 = vector.load %arg2[%c0_1, %c0_2] : memref<16x224xf32, #tpu.memory_space<vmem>>, vector<16x224xf32>
    %cst = arith.constant dense<0.000000e+00> : vector<16x224xf32>
    %2 = tpu.matmul %0, %1, %cst {dimension_numbers = #tpu.dot_dimension_numbers<[1], [0], [0], [1], [0, 0, 1, 1], [], []>} : vector<16x16xf32>, vector<16x224xf32>, vector<16x224xf32> -> vector<16x224xf32>
    %c0_3 = arith.constant 0 : index
    %c0_4 = arith.constant 0 : index
    %3 = vector.load %arg3[%c0_3, %c0_4] : memref<1x224xf32, #tpu.memory_space<vmem>>, vector<1x224xf32>
    %4 = vector.broadcast %3 : vector<1x224xf32> to vector<16x224xf32>
    %5 = arith.addf %2, %4 : vector<16x224xf32>
    %c0_5 = arith.constant 0 : index
    %c0_6 = arith.constant 0 : index
    %6 = vector.load %arg4[%c0_5, %c0_6] : memref<16x224xf32, #tpu.memory_space<vmem>>, vector<16x224xf32>
    tpu.vector_store %arg4[%c0_5, %c0_6], %5 {strides = array<i32>} : memref<16x224xf32, #tpu.memory_space<vmem>>, vector<16x224xf32>,
    return
  }
  func.func @transform_0(%arg0: i32) -> (i32, i32) {
    %c0_i32 = arith.constant 0 : i32
    %c0_i32_0 = arith.constant 0 : i32
    return %arg0, %c0_i32 : i32, i32
  }
  func.func @transform_1(%arg0: i32) -> (i32, i32) {
    %c0_i32 = arith.constant 0 : i32
    %c0_i32_0 = arith.constant 0 : i32
    %c0_i32_1 = arith.constant 0 : i32
    return %c0_i32, %c0_i32_0 : i32, i32
  }
  func.func @transform_2(%arg0: i32) -> (i32, i32) {
    %c0_i32 = arith.constant 0 : i32
    %c0_i32_0 = arith.constant 0 : i32
    %c0_i32_1 = arith.constant 0 : i32
    return %c0_i32, %c0_i32_0 : i32, i32
  }
  func.func @transform_3(%arg0: i32) -> (i32, i32) {
    %c0_i32 = arith.constant 0 : i32
    %c0_i32_0 = arith.constant 0 : i32
    return %arg0, %c0_i32 : i32, i32
  }
}

</mosaic_0001>

<llo_original>
// kernel: tpu_custom_call.1
$region0: #{tpu_custom_call.1}
  #allocation0 [shape = 'u32[]', space=smem, size = 0x4, offset = 0x4, fixed_abs, tag = 'smem constant byte address 0x4 - core index']
  #allocation1 [shape = 'u32[144,128]{1,0:T(1,128)}', space=vmem, size = 0x12000, scoped, tag = 'internal scratch']
  %s0 = inlined_call_operand.vmem [shape: f32[42,16], index: 0, kind: input, shape index: {}]
  %s1 = inlined_call_operand.vmem [shape: f32[16,224], index: 1, kind: input, shape index: {}]
  %s2 = inlined_call_operand.vmem [shape: f32[1,224], index: 2, kind: input, shape index: {}]
  %s3 = inlined_call_operand.hbm [shape: f32[42,224], index: 3, kind: output, shape index: {}]
  %s4 = sld [smem:[#allocation0]]
  $region45: #{tpu_custom_call.1} parent=0
    _
  %s6 = ssub.s32 1, %s4
  %s7 = scalar_select 0, %s6, %s4
  $region1: #{tpu_custom_call.1} parent=0
    #allocation2 [shape = 'u8[32768]{0}', space=vmem, size = 0x8000, scoped, tag = 'output window, operand 0']
    #allocation3 [shape = 's32[2]{0}', space=sflag, size = 0x8, scoped, tag = 'scoped memory for tpu_custom_call.1']
    %8 = vsyncpa [#allocation3], 0
    %s9 = scalar_lea.sflag [#allocation3], 1
    %10 = vsyncpa %s9, 0
    loop: start=0, step=1, limit=5
    $region2: #{tpu_custom_call.1} parent=1 // loop_pre_header
      _
    $region3: #{tpu_custom_call.1} parent=1 // loop_header
      %s12 = sphi 0, %s16
      %p13 = scmp.ge.s32.totalorder %s12, 5
      %s22 = sphi 0, %s24
      %s25 = sphi 0, %s22
      %s26 = sphi 0, %s25
      %s42 = sphi 0, %s26
      %s46 = sphi 0, %s46
      %s48 = sphi 0, %s46
      %s49 = sphi 0, %s48
      %s63 = sphi 0, %s49
      %s67 = sphi 0, %s67
      %s69 = sphi 0, %s67
      %s70 = sphi 0, %s69
      %s84 = sphi 0, %s70
      %s90 = sphi 0, %s92
      %s93 = sphi 0, %s90
      %s94 = sphi 0, %s93
      %s110 = sphi 0, %s94
    $region4: #{tpu_custom_call.1} parent=1 // loop_header_branch
      %15 = sbr.rel (%p13) target = $region8
    $region5: #{tpu_custom_call.1} parent=1 // loop_body
      %s17 = ssub.s32 %s12, 1
      %s18 = ssub.s32 %s12, 2
      %s19 = sadd.s32 %s12, 1
      %s20 = ssub.s32 %s12, %s19
      %p21 = scmp.eq.s32.totalorder %s20, 0
      %s23 = sadd.s32 %s22, 1
      %s24 = scalar_select %p21, %s22, %s23
      %p27 = pneg %p21
      %p28 = scmp.eq.s32.totalorder %s12, 2
      %p29 = por %p27, %p28
      %p30 = scmp.ne.s32.totalorder %s22, %s25
      %p31 = scmp.eq.s32.totalorder %s12, 0
      %p32 = por %p30, %p31
      %p33 = scmp.ne.s32.totalorder %s22, %s25
      %p34 = scmp.eq.s32.totalorder %s17, 2
      %p35 = por %p33, %p34
      %p36 = scmp.ne.s32.totalorder %s25, %s26
      %p37 = scmp.eq.s32.totalorder %s17, 0
      %p38 = por %p36, %p37
      %p39 = scmp.ne.s32.totalorder %s25, %s26
      %p40 = scmp.eq.s32.totalorder %s18, 2
      %p41 = por %p39, %p40
      %p43 = scmp.ne.s32.totalorder %s26, %s42
      %p44 = scmp.eq.s32.totalorder %s18, 0
      %p45 = por %p43, %p44
      %s47 = sadd.s32 %s46, 1
      %p50 = scmp.eq.s32.totalorder %s12, 2
      %p51 = scmp.ne.s32.totalorder %s46, %s48
      %p52 = scmp.eq.s32.totalorder %s12, 0
      %p53 = por %p51, %p52
      %p54 = scmp.ne.s32.totalorder %s46, %s48
      %p55 = scmp.eq.s32.totalorder %s17, 2
      %p56 = por %p54, %p55
      %p57 = scmp.ne.s32.totalorder %s48, %s49
      %p58 = scmp.eq.s32.totalorder %s17, 0
      %p59 = por %p57, %p58
      %p60 = scmp.ne.s32.totalorder %s48, %s49
      %p61 = scmp.eq.s32.totalorder %s18, 2
      %p62 = por %p60, %p61
      %p64 = scmp.ne.s32.totalorder %s49, %s63
      %p65 = scmp.eq.s32.totalorder %s18, 0
      %p66 = por %p64, %p65
      %s68 = sadd.s32 %s67, 1
      %p71 = scmp.eq.s32.totalorder %s12, 2
      %p72 = scmp.ne.s32.totalorder %s67, %s69
      %p73 = scmp.eq.s32.totalorder %s12, 0
      %p74 = por %p72, %p73
      %p75 = scmp.ne.s32.totalorder %s67, %s69
      %p76 = scmp.eq.s32.totalorder %s17, 2
      %p77 = por %p75, %p76
      %p78 = scmp.ne.s32.totalorder %s69, %s70
      %p79 = scmp.eq.s32.totalorder %s17, 0
      %p80 = por %p78, %p79
      %p81 = scmp.ne.s32.totalorder %s69, %s70
      %p82 = scmp.eq.s32.totalorder %s18, 2
      %p83 = por %p81, %p82
      %p85 = scmp.ne.s32.totalorder %s70, %s84
      %p86 = scmp.eq.s32.totalorder %s18, 0
      %p87 = por %p85, %p86
      %s88 = ssub.s32 %s12, %s19
      %p89 = scmp.eq.s32.totalorder %s88, 0
      %s91 = sadd.s32 %s90, 1
      %s92 = scalar_select %p89, %s90, %s91
      %p95 = pneg %p89
      %p96 = scmp.eq.s32.totalorder %s12, 2
      %p97 = por %p95, %p96
      %p98 = scmp.ne.s32.totalorder %s90, %s93
      %p99 = scmp.eq.s32.totalorder %s12, 0
      %p100 = por %p98, %p99
      %p101 = scmp.ne.s32.totalorder %s90, %s93
      %p102 = scmp.eq.s32.totalorder %s17, 2
      %p103 = por %p101, %p102
      %p104 = scmp.ne.s32.totalorder %s93, %s94
      %p105 = scmp.eq.s32.totalorder %s17, 0
      %p106 = por %p104, %p105
      %p107 = scmp.ne.s32.totalorder %s93, %s94
      %p108 = scmp.eq.s32.totalorder %s18, 2
      %p109 = por %p107, %p108
      %p111 = scmp.ne.s32.totalorder %s94, %s110
      %p112 = scmp.eq.s32.totalorder %s18, 0
      %p113 = por %p111, %p112
      %p114 = scmp.le.s32.totalorder 1, %s12
      %p115 = scmp.lt.s32.totalorder %s12, 4
      %p116 = pnand %p114, %p115
      %p117 = pneg %p116
      // Predicated region
      $region9: #{tpu_custom_call.1} parent=5 // pred_check
        _
      $region10: #{tpu_custom_call.1} parent=5 // pred_check_branch
        %119 = sbr.rel (%p116) target = $region12
      $region11: #{tpu_custom_call.1} parent=5 // pred_region
        %s120 = ssub.s32 %s12, 1
        // Predicated region
        $region13: #{tpu_custom_call.1} parent=11 // pred_check
          %p121 = pneg %p59
        $region14: #{tpu_custom_call.1} parent=11 // pred_check_branch
          %123 = sbr.rel (%p121) target = $region16
        $region15: #{tpu_custom_call.1} parent=11 // pred_region
          _
        $region16: #{tpu_custom_call.1} parent=11 // pred_fallthru
          _
        // Predicated region
        $region17: #{tpu_custom_call.1} parent=11 // pred_check
          %p124 = pneg %p80
        $region18: #{tpu_custom_call.1} parent=11 // pred_check_branch
          %126 = sbr.rel (%p124) target = $region20
        $region19: #{tpu_custom_call.1} parent=11 // pred_region
          _
        $region20: #{tpu_custom_call.1} parent=11 // pred_fallthru
          _
      $region12: #{tpu_custom_call.1} parent=5 // pred_fallthru
        _
      %p127 = scmp.lt.s32.totalorder %s12, 3
      // Predicated region
      $region21: #{tpu_custom_call.1} parent=5 // pred_check
        %p128 = pneg %p127
      $region22: #{tpu_custom_call.1} parent=5 // pred_check_branch
        %130 = sbr.rel (%p128) target = $region24
      $region23: #{tpu_custom_call.1} parent=5 // pred_region
        // Predicated region
        $region25: #{tpu_custom_call.1} parent=23 // pred_check
          %p131 = pneg %p32
        $region26: #{tpu_custom_call.1} parent=23 // pred_check_branch
          %133 = sbr.rel (%p131) target = $region28
        $region27: #{tpu_custom_call.1} parent=23 // pred_region
          %s134 = smul.u32 2, %s12
          %p135 = scmp.lt.s32.totalorder %s134, 5
          %s136 = scalar_select %p135, %s134, 5
          %s137 = smul.addr %s136, 8
          %s138 = scalar_lea.vmem %s0, %s137
          %s139 = smul.u32 2, %s12
        $region28: #{tpu_custom_call.1} parent=23 // pred_fallthru
          _
      $region24: #{tpu_custom_call.1} parent=5 // pred_fallthru
        _
      %p140 = scmp.le.s32.totalorder 1, %s12
      %p141 = scmp.lt.s32.totalorder %s12, 4
      %p142 = pnand %p140, %p141
      %p143 = pneg %p142
      // Predicated region
      $region29: #{tpu_custom_call.1} parent=5 // pred_check
        _
      $region30: #{tpu_custom_call.1} parent=5 // pred_check_branch
        %145 = sbr.rel (%p142) target = $region32
      $region31: #{tpu_custom_call.1} parent=5 // pred_region
        %s146 = ssub.s32 %s12, 1
        %s147 = smul.u32 2, %s17
        %p148 = scmp.lt.s32.totalorder %s147, 5
        %s149 = scalar_select %p148, %s147, 5
        %s150 = smul.addr %s149, 8
        %s151 = scalar_lea.vmem %s0, %s150
        %p152 = pneg %p38
        %p153 = pneg %p35
        %p154 = pneg %p59
        %p155 = pneg %p56
        %p156 = pneg %p80
        %p157 = pneg %p77
        %p158 = pneg %p106
        %p159 = pneg %p103
        %s160 = sand.u32 %s93, 1
        %s161 = scalar_lea.sflag [#allocation3], %s160
        %s162 = sand.u32 %s93, 1
        %s163 = smul.addr %s162, 32
        %s164 = scalar_lea.vmem [#allocation2], %s163
        %s165 = smul.u32 2, %s17
        %p166 = scmp.lt.s32.totalorder %s165, 5
        %s167 = scalar_select %p166, %s165, 5
        %s168 = smul.addr %s167, 8
        %s169 = scalar_lea.vmem %s0, %s168
        %s170 = smul.u32 2, %s17
        %s171 = smul.u32 2, %s17
        %v172 = vld [vmem:[%s169] sm:$0xff]
        %v173 = vld [vmem:[%s169 + $0x8] sm:$0xff]
        %v174 = vld [vmem:[%s1] sm:$0xff]
        %v175 = vld [vmem:[%s1 + $0x8] sm:$0xff]
        %v176 = vld [vmem:[%s1 + $0x10] sm:$0xff]
        %v177 = vld [vmem:[%s1 + $0x18] sm:$0xff]
        %v178 = vld [vmem:[%s2] sm:$0x3]
        %v180 = vlaneseq
        %v181 = vshrl.u32 %v180, 7
        %v182 = vsub.s32 0, %v181
        %v183 = vrot.slane %v178, %v182
        %v184 = vlaneseq
        %v185 = vshrl.u32 %v184, 7
        %v186 = vsub.s32 1, %v185
        %v187 = vrot.slane %v178, %v186
        %vm190 = vcmask 130048
        %v192 = vsel %vm190, %v172, 0
        %v195 = vsel %vm190, %v173, 0
        %197 = vmatprep.subr.mxu0 %v175
        %198 = vmatpush1.msra.mxu0 %v174
        %199 = vmatprep.subr.mxu0 %v177
        %200 = vmatpush1.msra.mxu0 %v176
        %201 = vmatprep.subr.mxu0 0.0
        %202 = vmatpush1.msra.mxu0 0.0
        %203 = vmatprep.subr.mxu0 0.0
        %204 = vmatpush1.msra.mxu0 0.0
        %205 = vmatprep.subr.mxu0 0.0
        %206 = vmatpush1.msra.mxu0 0.0
        %207 = vmatprep.subr.mxu0 0.0
        %208 = vmatpush1.msra.mxu0 0.0
        %209 = vmatprep.subr.mxu0 0.0
        %210 = vmatpush1.msra.mxu0 0.0
        %211 = vmatprep.subr.mxu0 0.0
        %212 = vmatpush1.msra.mxu0 0.0
        %213 = vmatprep.subr.mxu0 0.0
        %214 = vmatpush1.msra.mxu0 0.0
        %215 = vmatprep.subr.mxu0 0.0
        %216 = vmatpush1.msra.mxu0 0.0
        %217 = vmatprep.subr.mxu0 0.0
        %218 = vmatpush1.msra.mxu0 0.0
        %219 = vmatprep.subr.mxu0 0.0
        %220 = vmatpush1.msra.mxu0 0.0
        %221 = vmatprep.subr.mxu0 0.0
        %222 = vmatpush1.msra.mxu0 0.0
        %223 = vmatprep.subr.mxu0 0.0
        %224 = vmatpush1.msra.mxu0 0.0
        %225 = vmatprep.subr.mxu0 0.0
        %226 = vmatpush1.msra.mxu0 0.0
        %227 = vmatprep.subr.mxu0 0.0
        %228 = vmatpush1.msra.mxu0 0.0
        %229 = vmatprep.subr.mxu0 0.0
        %230 = vmatpush1.msra.mxu0 0.0
        %231 = vmatprep.subr.mxu0 0.0
        %232 = vmatpush1.msra.mxu0 0.0
        %233 = vmatprep.subr.mxu0 0.0
        %234 = vmatpush1.msra.mxu0 0.0
        %235 = vmatprep.subr.mxu0 0.0
        %236 = vmatpush1.msra.mxu0 0.0
        %237 = vmatprep.subr.mxu0 0.0
        %238 = vmatpush1.msra.mxu0 0.0
        %239 = vmatprep.subr.mxu0 0.0
        %240 = vmatpush1.msra.mxu0 0.0
        %241 = vmatprep.subr.mxu0 0.0
        %242 = vmatpush1.msra.mxu0 0.0
        %243 = vmatprep.subr.mxu0 0.0
        %244 = vmatpush1.msra.mxu0 0.0
        %245 = vmatprep.subr.mxu0 0.0
        %246 = vmatpush1.msra.mxu0 0.0
        %247 = vmatprep.subr.mxu0 0.0
        %248 = vmatpush1.msra.mxu0 0.0
        %249 = vmatprep.subr.mxu0 0.0
        %250 = vmatpush1.msra.mxu0 0.0
        %251 = vmatprep.subr.mxu0 0.0
        %252 = vmatpush1.msra.mxu0 0.0
        %253 = vmatprep.subr.mxu0 0.0
        %254 = vmatpush1.msra.mxu0 0.0
        %255 = vmatprep.subr.mxu0 0.0
        %256 = vmatpush1.msra.mxu0 0.0
        %257 = vmatprep.subr.mxu0 0.0
        %258 = vmatpush1.msra.mxu0 0.0
        %259 = vmatprep.subr.mxu0 0.0
        %260 = vmatpush1.msra.mxu0 0.0
        %261 = vmatprep.mubr.f32.mxu0 0.0
        %262 = vmatmul.mubr.f32.gmra.mrb[0].mxu0 %v192
        %v263 = vpop.f32.mrb[0].mxu0
        %v264 = vadd.f32 %v183, %v263
        %v265 = vpop.f32.mrb[0].mxu0
        %v266 = vadd.f32 %v187, %v265
        %267 = vmatprep.mubr.f32.mxu0 0.0
        %268 = vmatmul.mubr.f32.gmra.mrb[0].mxu0 %v195
        %v269 = vpop.f32.mrb[0].mxu0
        %v270 = vadd.f32 %v183, %v269
        %v271 = vpop.f32.mrb[0].mxu0
        %v272 = vadd.f32 %v187, %v271
        %273 = vdwg.mxu0
        %274 = vst [vmem:[%s164] sm:$0xff] %v264
        %vm275 = vcmask 785408
        %276 = vst.msk [vmem:[%s164 + $0x8] sm:$0xff] %vm275, %v266
        %277 = vst [vmem:[%s164 + $0x10] sm:$0xff] %v270
        %278 = vst.msk [vmem:[%s164 + $0x18] sm:$0xff] %vm275, %v272
        %s279 = sand.u32 %s93, 1
        %s280 = scalar_lea.sflag [#allocation3], %s279
        %s281 = sand.u32 %s93, 1
        %s282 = smul.addr %s281, 32
        %s283 = scalar_lea.vmem [#allocation2], %s282
        // Predicated region
        $region33: #{tpu_custom_call.1} parent=31 // pred_check
          %p284 = pneg %p103
        $region34: #{tpu_custom_call.1} parent=31 // pred_check_branch
          %286 = sbr.rel (%p284) target = $region36
        $region35: #{tpu_custom_call.1} parent=31 // pred_region
          %s287 = smul.u32 2, %s17
          %s289 = ssub.s32 512, 512
          %290 = vsyncadd %s280, %s289
          %s291 = smul.addr %s287, 2
          %s292 = smul.addr %s291, 128
          %s293 = scalar_lea.hbm %s3, %s292
          %s294 = sshll.u32 %s283, 4
          %s295 = int_to_ptr.vmem [resolvable:$true] %s294
          %300 = dma.vmem_to_hbm [thread:$0]  %s295, 512, %s293, %s280, 256, 256, 16
        $region36: #{tpu_custom_call.1} parent=31 // pred_fallthru
          _
      $region32: #{tpu_custom_call.1} parent=5 // pred_fallthru
        _
      %p301 = scmp.le.s32.totalorder 2, %s12
      // Predicated region
      $region37: #{tpu_custom_call.1} parent=5 // pred_check
        %p302 = pneg %p301
      $region38: #{tpu_custom_call.1} parent=5 // pred_check_branch
        %304 = sbr.rel (%p302) target = $region40
      $region39: #{tpu_custom_call.1} parent=5 // pred_region
        %s305 = ssub.s32 %s12, 2
        // Predicated region
        $region41: #{tpu_custom_call.1} parent=39 // pred_check
          %p306 = pneg %p109
        $region42: #{tpu_custom_call.1} parent=39 // pred_check_branch
          %308 = sbr.rel (%p306) target = $region44
        $region43: #{tpu_custom_call.1} parent=39 // pred_region
          %s309 = sand.u32 %s94, 1
          %s310 = scalar_lea.sflag [#allocation3], %s309
          %s311 = sand.u32 %s94, 1
          %s312 = smul.addr %s311, 32
          %s313 = scalar_lea.vmem [#allocation2], %s312
          %314 = dma.done %s310, 512
        $region44: #{tpu_custom_call.1} parent=39 // pred_fallthru
          _
      $region40: #{tpu_custom_call.1} parent=5 // pred_fallthru
        _
    $region6: #{tpu_custom_call.1} parent=1 // loop_footer
      %s16 = sadd.s32 1, %s12
    $region7: #{tpu_custom_call.1} parent=1 // loop_footer_branch
      %11 = sbr.rel target = $region3
    $region8: #{tpu_custom_call.1} parent=1 // loop_exit
      _
    %315 = vsyncpa [#allocation3], 1
    %s316 = scalar_lea.sflag [#allocation3], 1
    %317 = vsyncpa %s316, 1

</llo_original>
